<compile_context>
chip_gen: v7x
topology: tpu7x:2x2x1
jax: 0.10.0
libtpu: 0.0.40
codegen_flags: <defaults>
</compile_context>

<pallas_src>
import functools

import jax
import jax.numpy as jnp
from jax.experimental import pallas as pl
from jax.experimental.pallas import tpu as pltpu


def _round_up(v, m):
    return (v + m - 1) // m * m


def _vmem_budget_bytes():
    # Conservative default (v7x physical VMEM) if the query is unavailable.
    phys = 64 * 1024 * 1024
    try:
        info = pltpu.get_tpu_info()
        phys = getattr(info, "vmem_capacity_bytes", phys) or phys
    except Exception:
        pass
    return int(min(int(phys * 0.7), 96 * 1024 * 1024))


def _pick_hw_tile(hwp, cap):
    # largest multiple of 128 that divides hwp and is <= cap (min 128)
    m = hwp // 128
    best = 128
    for d in range(1, m + 1):
        if m % d == 0 and 128 * d <= cap:
            best = 128 * d
    return best


# ----------------------------------------------------------------------------
# attention2d MLP: fc1 (no bias) -> relu -> fc2 (+bias) -> softmax(logits / T)
# (global average pool is done in plain XLA in the wrapper; T is static)
# ----------------------------------------------------------------------------
def _attention_kernel(pooled_ref, w1t_ref, w2t_ref, b2_ref, attn_ref, *,
                      inv_temperature):
    # pooled: (B, Cin); w1t: (Cin, hidden); w2t: (hidden, K); b2: (1, K)
    h = jnp.dot(pooled_ref[...], w1t_ref[...], preferred_element_type=jnp.float32)
    h = jnp.maximum(h, 0.0)
    logits = jnp.dot(h, w2t_ref[...], preferred_element_type=jnp.float32)
    logits = logits + b2_ref[...]
    z = logits * inv_temperature
    z = z - jnp.max(z, axis=1, keepdims=True)
    e = jnp.exp(z)
    attn_ref[...] = e / jnp.sum(e, axis=1, keepdims=True)


# ----------------------------------------------------------------------------
# fused per-sample aggregation (cached in VMEM scratch) + im2col convolution
# ----------------------------------------------------------------------------
def _dyn_conv_kernel(attn_ref, patch_ref, w_ref, out_ref, agg_ref, *, num_kernel):
    # attn_ref : (B, K) f32 in SMEM (scalar prefetch)
    # patch_ref: (1, Ckk1p, t_hw)  im2col patches (+ ones row, zero-padded rows)
    # w_ref    : (K, t_co, Ckk1p)  candidate kernels (+ bias col), VMEM-resident
    # out_ref  : (1, t_co, t_hw)
    # agg_ref  : (t_co, Ckk1p)     VMEM scratch with the aggregated kernel
    b = pl.program_id(1)

    # Recompute the aggregated weight only on the first HW tile of each (co, b)
    # pair; the f32 weighted sum (VPU) + cast are amortized over all HW tiles.
    @pl.when(pl.program_id(2) == 0)
    def _():
        agg = attn_ref[b, 0] * w_ref[0]          # f32 accumulation
        for k in range(1, num_kernel):
            agg = agg + attn_ref[b, k] * w_ref[k]
        agg_ref[...] = agg.astype(agg_ref.dtype)

    # single lane-dense MXU matmul: (t_co, Ckk1p) @ (Ckk1p, t_hw) -> f32 acc
    acc = jnp.dot(agg_ref[...], patch_ref[0], preferred_element_type=jnp.float32)
    out_ref[0] = acc.astype(out_ref.dtype)


# ----------------------------------------------------------------------------
# wrapper-side im2col (exact slices; stride/dilation handled here, not in-kernel)
# ----------------------------------------------------------------------------
def _im2col(x, ks, stride, padding, dilation):
    B, Cin, H, W = x.shape
    Hout = (H + 2 * padding - dilation * (ks - 1) - 1) // stride + 1
    Wout = (W + 2 * padding - dilation * (ks - 1) - 1) // stride + 1
    xp = jnp.pad(x, ((0, 0), (0, 0), (padding, padding), (padding, padding)))
    taps = []
    for ky in range(ks):
        for kx in range(ks):
            y0 = ky * dilation
            x0 = kx * dilation
            taps.append(jax.lax.slice(
                xp, (0, 0, y0, x0),
                (B, Cin, y0 + (Hout - 1) * stride + 1,
                 x0 + (Wout - 1) * stride + 1),
                (1, 1, stride, stride)))
    # (B, Cin, k*k, Hout, Wout) -> (B, Cin*k*k, Hout*Wout); ordering c*k*k + ky*k + kx
    patches = jnp.stack(taps, axis=2)
    return patches.reshape(B, Cin * ks * ks, Hout * Wout), Hout, Wout


# ----------------------------------------------------------------------------
# wrapper = Dynamic_conv2d.forward
# ----------------------------------------------------------------------------
def dynamic_conv2d(x, params, *, kernel_size, stride=1, padding=0, dilation=1,
                   groups=1, num_kernel=4, temperature=1.0,
                   compute_dtype=jnp.bfloat16, out_dtype=None,
                   hw_tile=2048, cout_tile=1024):
    assert groups == 1  # TODO(synk): grouped conv (groups > 1) not implemented
    if out_dtype is None:
        out_dtype = compute_dtype
    x = x.astype(jnp.float32)
    B, Cin, H, W = x.shape
    K = num_kernel
    Cout = params["weight"].shape[1]
    ks = kernel_size

    # ---- attention: pool in XLA, MLP + softmax in a tiny Pallas kernel ----
    pooled = jnp.mean(x, axis=(2, 3))                     # AdaptiveAvgPool2d(1)
    attn = pl.pallas_call(
        functools.partial(_attention_kernel,
                          inv_temperature=1.0 / float(temperature)),
        out_shape=jax.ShapeDtypeStruct((B, K), jnp.float32),
        in_specs=[
            pl.BlockSpec(memory_space=pltpu.MemorySpace.VMEM),   # pooled (B, Cin)
            pl.BlockSpec(memory_space=pltpu.MemorySpace.VMEM),   # fc1 weight^T
            pl.BlockSpec(memory_space=pltpu.MemorySpace.VMEM),   # fc2 weight^T
            pl.BlockSpec(memory_space=pltpu.MemorySpace.VMEM),   # fc2 bias (1, K)
        ],
        out_specs=pl.BlockSpec(memory_space=pltpu.MemorySpace.VMEM),
    )(pooled, params["fc1_w"].T, params["fc2_w"].T, params["fc2_b"].reshape(1, K))

    # ---- im2col patches + weight layout with contraction on the lane axis ----
    patches, Hout, Wout = _im2col(x, ks, stride, padding, dilation)
    HW = Hout * Wout
    Ckk = Cin * ks * ks

    wflat = params["weight"].reshape(K, Cout, Ckk)        # (K, Cout, Cin*k*k)
    bias = params.get("bias")
    if bias is not None:
        # fold bias into the matmul: ones row on patches, bias column on weights
        patches = jnp.concatenate(
            [patches, jnp.ones((B, 1, HW), patches.dtype)], axis=1)
        wflat = jnp.concatenate([wflat, bias[:, :, None]], axis=2)
    Ckk1 = wflat.shape[2]

    # zero-pad the contraction dim to the sublane pack (8 for f32, 16 for bf16)
    isz = jnp.dtype(compute_dtype).itemsize
    pack = 8 * (4 // isz)
    Ckk1p = _round_up(Ckk1, pack)
    if Ckk1p != Ckk1:
        patches = jnp.pad(patches, ((0, 0), (0, Ckk1p - Ckk1), (0, 0)))
        wflat = jnp.pad(wflat, ((0, 0), (0, 0), (0, Ckk1p - Ckk1)))

    # HW: pad only to the next multiple of 128; t_hw divides HWp exactly, so the
    # post-kernel trim wastes at most 127 lanes (and is skipped when HW % 128 == 0)
    HWp = _round_up(HW, 128)
    if HWp != HW:
        patches = jnp.pad(patches, ((0, 0), (0, 0), (0, HWp - HW)))

    # ---- tile sizing against the device VMEM budget ----
    out_isz = jnp.dtype(out_dtype).itemsize
    t_co = Cout if Cout <= cout_tile else cout_tile       # prefer n_co == 1
    t_hw = _pick_hw_tile(HWp, hw_tile)
    budget = _vmem_budget_bytes()

    def _footprint(tc, th):
        return (2 * Ckk1p * th * isz           # patch tile, double-buffered
                + 2 * K * tc * Ckk1p * isz     # weight block, double-buffered
                + 2 * tc * th * out_isz        # out tile, double-buffered
                + tc * Ckk1p * isz)            # agg scratch

    while _footprint(t_co, t_hw) > budget and t_hw > 128:
        t_hw = _pick_hw_tile(HWp, t_hw - 128)
    while _footprint(t_co, t_hw) > budget and t_co > 8:
        t_co = max(8, _round_up(t_co // 2, 8))

    n_co = pl.cdiv(Cout, t_co)
    n_hw = HWp // t_hw

    patches = patches.astype(compute_dtype)
    wflat = wflat.astype(compute_dtype)

    kernel = functools.partial(_dyn_conv_kernel, num_kernel=K)
    out_flat = pl.pallas_call(
        kernel,
        out_shape=jax.ShapeDtypeStruct((B, Cout, HWp), out_dtype),
        grid_spec=pltpu.PrefetchScalarGridSpec(
            num_scalar_prefetch=1,                         # attn -> SMEM
            # grid = (co, b, hw): weight block re-DMAs only when co changes,
            # patches are read exactly once; hw innermost for the agg cache.
            grid=(n_co, B, n_hw),
            in_specs=[
                # patches for sample b, HW tile hw
                pl.BlockSpec((1, Ckk1p, t_hw), lambda co, b, hw, attn: (b, 0, hw)),
                # all K candidate kernels for Cout tile co (VMEM-resident)
                pl.BlockSpec((K, t_co, Ckk1p), lambda co, b, hw, attn: (0, co, 0)),
            ],
            out_specs=pl.BlockSpec((1, t_co, t_hw),
                                   lambda co, b, hw, attn: (b, co, hw)),
            scratch_shapes=[pltpu.VMEM((t_co, Ckk1p), compute_dtype)],
        ),
        compiler_params=pltpu.CompilerParams(
            # hw must be "arbitrary" (agg scratch init at hw==0); co/b parallel
            # so megacore (v7x) shards on them.
            dimension_semantics=("parallel", "parallel", "arbitrary"),
            vmem_limit_bytes=budget),
    )(attn, patches, wflat)

    if HWp != HW:
        out_flat = out_flat[:, :, :HW]
    return out_flat.reshape(B, Cout, Hout, Wout)


# ----------------------------------------------------------------------------
# pure-JAX reference (mirrors the PyTorch forward) for correctness checking
# ----------------------------------------------------------------------------
def dynamic_conv2d_ref(x, params, *, kernel_size, stride=1, padding=0, dilation=1,
                       num_kernel=4, temperature=1.0):
    x = x.astype(jnp.float32)
    B, Cin, H, W = x.shape
    K = num_kernel
    Cout = params["weight"].shape[1]
    ks = kernel_size

    pooled = jnp.mean(x, axis=(2, 3))
    h = jnp.maximum(pooled @ params["fc1_w"].T, 0.0)
    logits = h @ params["fc2_w"].T + params["fc2_b"]
    attn = jax.nn.softmax(logits / temperature, axis=1)

    wflat = params["weight"].reshape(K, -1)
    agg_w = (attn @ wflat).reshape(B, Cout, Cin, ks, ks)
    agg_b = attn @ params["bias"]                          # (B, Cout)

    outs = []
    for b in range(B):
        o = jax.lax.conv_general_dilated(
            x[b:b + 1], agg_w[b],
            window_strides=(stride, stride),
            padding=[(padding, padding), (padding, padding)],
            rhs_dilation=(dilation, dilation),
            dimension_numbers=("NCHW", "OIHW", "NCHW"))
        outs.append(o + agg_b[b][None, :, None, None])
    return jnp.concatenate(outs, axis=0)


if __name__ == "__main__":
    # module config (groups=1, bias=True)
    B, Cin, H, W = 2, 4, 16, 16
    Cout, ks, num_kernel, ratio = 8, 3, 4, 0.25
    hidden = int(Cin * ratio) + 1 if Cin != 3 else num_kernel
    temperature = 1.0

    key = jax.random.PRNGKey(0)
    kx, kw, kb, k1, k2 = jax.random.split(key, 5)

    fan_in = Cin * ks * ks
    bound = (6.0 / fan_in) ** 0.5                          # kaiming_uniform-like
    params = {
        "weight": jax.random.uniform(kw, (num_kernel, Cout, Cin, ks, ks),
                                     jnp.float32, -bound, bound),
        "bias": 0.1 * jax.random.normal(kb, (num_kernel, Cout), jnp.float32),
        "fc1_w": jax.random.normal(k1, (hidden, Cin), jnp.float32) * (2.0 / hidden) ** 0.5,
        "fc2_w": jax.random.normal(k2, (num_kernel, hidden), jnp.float32) * (2.0 / num_kernel) ** 0.5,
        "fc2_b": jnp.zeros((num_kernel,), jnp.float32),
    }
    x = jax.random.normal(kx, (B, Cin, H, W), jnp.float32)

    # --- stride=1 / padding=1 config ---
    ref = jax.block_until_ready(dynamic_conv2d_ref(
        x, params, kernel_size=ks, stride=1, padding=1, dilation=1,
        num_kernel=num_kernel, temperature=temperature))

    # f32 MXU path (tight correctness check)
    out_f32 = jax.block_until_ready(dynamic_conv2d(
        x, params, kernel_size=ks, stride=1, padding=1, dilation=1, groups=1,
        num_kernel=num_kernel, temperature=temperature,
        compute_dtype=jnp.float32))
    assert out_f32.shape == (B, Cout, H, W), out_f32.shape
    assert jnp.allclose(out_f32, ref, rtol=1e-3, atol=1e-3), \
        float(jnp.max(jnp.abs(out_f32 - ref)))

    # bf16 MXU path with bf16 output (perf config; looser numeric check)
    out_bf16 = jax.block_until_ready(dynamic_conv2d(
        x, params, kernel_size=ks, stride=1, padding=1, dilation=1, groups=1,
        num_kernel=num_kernel, temperature=temperature,
        compute_dtype=jnp.bfloat16))
    assert out_bf16.shape == (B, Cout, H, W), out_bf16.shape
    assert out_bf16.dtype == jnp.bfloat16, out_bf16.dtype
    assert jnp.allclose(out_bf16.astype(jnp.float32), ref, rtol=1e-1, atol=1e-1), \
        float(jnp.max(jnp.abs(out_bf16.astype(jnp.float32) - ref)))

    # --- stride=2 config (stride handled wrapper-side in im2col; HW < 128 path) ---
    ref_s2 = jax.block_until_ready(dynamic_conv2d_ref(
        x, params, kernel_size=ks, stride=2, padding=1, dilation=1,
        num_kernel=num_kernel, temperature=temperature))
    out_s2 = jax.block_until_ready(dynamic_conv2d(
        x, params, kernel_size=ks, stride=2, padding=1, dilation=1, groups=1,
        num_kernel=num_kernel, temperature=temperature,
        compute_dtype=jnp.float32))
    assert out_s2.shape == ref_s2.shape, (out_s2.shape, ref_s2.shape)
    assert jnp.allclose(out_s2, ref_s2, rtol=1e-3, atol=1e-3), \
        float(jnp.max(jnp.abs(out_s2 - ref_s2)))

    print("KERNEL_OK")
</pallas_src>

<mosaic_0001>
module attributes {stable_mosaic.version = 11 : i64} {
  func.func @_attention_kernel(%arg0: memref<2x4xf32, #tpu.memory_space<vmem>>, %arg1: memref<4x2xf32, #tpu.memory_space<vmem>>, %arg2: memref<2x4xf32, #tpu.memory_space<vmem>>, %arg3: memref<1x4xf32, #tpu.memory_space<vmem>>, %arg4: memref<2x4xf32, #tpu.memory_space<vmem>>) attributes {dimension_semantics = [], scalar_prefetch = 0 : i64, scratch_operands = 0 : i64, tpu.core_type = #tpu.core_type<tc>} {
    %c0 = arith.constant 0 : index
    %c0_0 = arith.constant 0 : index
    %0 = vector.load %arg0[%c0, %c0_0] : memref<2x4xf32, #tpu.memory_space<vmem>>, vector<2x4xf32>
    %c0_1 = arith.constant 0 : index
    %c0_2 = arith.constant 0 : index
    %1 = vector.load %arg1[%c0_1, %c0_2] : memref<4x2xf32, #tpu.memory_space<vmem>>, vector<4x2xf32>
    %cst = arith.constant dense<0.000000e+00> : vector<2x2xf32>
    %2 = tpu.matmul %0, %1, %cst {dimension_numbers = #tpu.dot_dimension_numbers<[1], [0], [0], [1], [0, 0, 1, 1], [], []>} : vector<2x4xf32>, vector<4x2xf32>, vector<2x2xf32> -> vector<2x2xf32>
    %cst_3 = arith.constant 0.000000e+00 : f32
    %3 = vector.broadcast %cst_3 : f32 to vector<2x2xf32>
    %4 = arith.maximumf %2, %3 : vector<2x2xf32>
    %c0_4 = arith.constant 0 : index
    %c0_5 = arith.constant 0 : index
    %5 = vector.load %arg2[%c0_4, %c0_5] : memref<2x4xf32, #tpu.memory_space<vmem>>, vector<2x4xf32>
    %cst_6 = arith.constant dense<0.000000e+00> : vector<2x4xf32>
    %6 = tpu.matmul %4, %5, %cst_6 {dimension_numbers = #tpu.dot_dimension_numbers<[1], [0], [0], [1], [0, 0, 1, 1], [], []>} : vector<2x2xf32>, vector<2x4xf32>, vector<2x4xf32> -> vector<2x4xf32>
    %c0_7 = arith.constant 0 : index
    %c0_8 = arith.constant 0 : index
    %7 = vector.load %arg3[%c0_7, %c0_8] : memref<1x4xf32, #tpu.memory_space<vmem>>, vector<1x4xf32>
    %8 = vector.broadcast %7 : vector<1x4xf32> to vector<2x4xf32>
    %9 = arith.addf %6, %8 : vector<2x4xf32>
    %cst_9 = arith.constant 1.000000e+00 : f32
    %10 = vector.broadcast %cst_9 : f32 to vector<2x4xf32>
    %11 = arith.mulf %9, %10 : vector<2x4xf32>
    %cst_10 = arith.constant dense<0xFF800000> : vector<2xf32>
    %12 = vector.multi_reduction <maximumf>, %11, %cst_10 [1] : vector<2x4xf32> to vector<2xf32>
    %13 = vector.shape_cast %12 : vector<2xf32> to vector<2x1xf32>
    %14 = vector.broadcast %13 : vector<2x1xf32> to vector<2x4xf32>
    %15 = arith.subf %11, %14 : vector<2x4xf32>
    %16 = math.exp %15 : vector<2x4xf32>
    %cst_11 = arith.constant dense<0.000000e+00> : vector<2xf32>
    %17 = vector.multi_reduction <add>, %16, %cst_11 [1] : vector<2x4xf32> to vector<2xf32>
    %18 = vector.shape_cast %17 : vector<2xf32> to vector<2x1xf32>
    %19 = vector.broadcast %18 : vector<2x1xf32> to vector<2x4xf32>
    %20 = arith.divf %16, %19 : vector<2x4xf32>
    %c0_12 = arith.constant 0 : index
    %c0_13 = arith.constant 0 : index
    %21 = vector.load %arg4[%c0_12, %c0_13] : memref<2x4xf32, #tpu.memory_space<vmem>>, vector<2x4xf32>
    tpu.vector_store %arg4[%c0_12, %c0_13], %20 {strides = array<i32>} : memref<2x4xf32, #tpu.memory_space<vmem>>, vector<2x4xf32>,
    return
  }
}

</mosaic_0001>

<llo_original>
// kernel: tpu_custom_call.1
$region0: #{tpu_custom_call.1}
  #allocation0 [shape = 'u32[]', space=smem, size = 0x4, offset = 0x4, fixed_abs, tag = 'smem constant byte address 0x4 - core index']
  #allocation1 [shape = 'u32[144,128]{1,0:T(1,128)}', space=vmem, size = 0x12000, scoped, tag = 'internal scratch']
  %s0 = inlined_call_operand.vmem [shape: f32[2,4], index: 0, kind: input, shape index: {}]
  %s1 = inlined_call_operand.vmem [shape: f32[4,2], index: 1, kind: input, shape index: {}]
  %s2 = inlined_call_operand.vmem [shape: f32[2,4], index: 2, kind: input, shape index: {}]
  %s3 = inlined_call_operand.vmem [shape: f32[1,4], index: 3, kind: input, shape index: {}]
  %s4 = inlined_call_operand.hbm [shape: f32[2,4], index: 4, kind: output, shape index: {}]
  %s5 = sld [smem:[#allocation0]]
  $region26: #{tpu_custom_call.1} parent=0
    _
  %s7 = ssub.s32 1, %s5
  %s8 = scalar_select 0, %s7, %s5
  $region1: #{tpu_custom_call.1} parent=0
    #allocation2 [shape = 'u8[1024]{0}', space=vmem, size = 0x400, scoped, tag = 'output window, operand 0, single buffered']
    #allocation3 [shape = 's32[1]{0}', space=sflag, size = 0x4, scoped, tag = 'scoped memory for tpu_custom_call.1']
    %9 = vsyncpa [#allocation3], 0
    // Predicated region
    $region2: #{tpu_custom_call.1} parent=1 // pred_check
      _
    $region3: #{tpu_custom_call.1} parent=1 // pred_check_branch
      %11 = sbr.rel (0) target = $region5
    $region4: #{tpu_custom_call.1} parent=1 // pred_region
      _
    $region5: #{tpu_custom_call.1} parent=1 // pred_fallthru
      _
    // Predicated region
    $region6: #{tpu_custom_call.1} parent=1 // pred_check
      _
    $region7: #{tpu_custom_call.1} parent=1 // pred_check_branch
      %13 = sbr.rel (0) target = $region9
    $region8: #{tpu_custom_call.1} parent=1 // pred_region
      _
    $region9: #{tpu_custom_call.1} parent=1 // pred_fallthru
      _
    // Predicated region
    $region10: #{tpu_custom_call.1} parent=1 // pred_check
      _
    $region11: #{tpu_custom_call.1} parent=1 // pred_check_branch
      %15 = sbr.rel (0) target = $region13
    $region12: #{tpu_custom_call.1} parent=1 // pred_region
      _
    $region13: #{tpu_custom_call.1} parent=1 // pred_fallthru
      _
    // Predicated region
    $region14: #{tpu_custom_call.1} parent=1 // pred_check
      _
    $region15: #{tpu_custom_call.1} parent=1 // pred_check_branch
      %17 = sbr.rel (0) target = $region17
    $region16: #{tpu_custom_call.1} parent=1 // pred_region
      _
    $region17: #{tpu_custom_call.1} parent=1 // pred_fallthru
      _
    %v18 = vld [vmem:[%s0] sm:$0x3]
    %v19 = vld [vmem:[%s1] sm:$0xf]
    %vm20 = vcmask 31744
    %v22 = vsel %vm20, %v18, 0
    %vm24 = vcmask 1043456
    %v26 = vsel %vm24, %v19, 0
    %28 = vmatprep.subr.mxu0 0.0
    %29 = vmatpush1.msra.mxu0 %v26
    %30 = vmatprep.subr.mxu0 0.0
    %31 = vmatpush1.msra.mxu0 0.0
    %32 = vmatprep.subr.mxu0 0.0
    %33 = vmatpush1.msra.mxu0 0.0
    %34 = vmatprep.subr.mxu0 0.0
    %35 = vmatpush1.msra.mxu0 0.0
    %36 = vmatprep.subr.mxu0 0.0
    %37 = vmatpush1.msra.mxu0 0.0
    %38 = vmatprep.subr.mxu0 0.0
    %39 = vmatpush1.msra.mxu0 0.0
    %40 = vmatprep.subr.mxu0 0.0
    %41 = vmatpush1.msra.mxu0 0.0
    %42 = vmatprep.subr.mxu0 0.0
    %43 = vmatpush1.msra.mxu0 0.0
    %44 = vmatprep.subr.mxu0 0.0
    %45 = vmatpush1.msra.mxu0 0.0
    %46 = vmatprep.subr.mxu0 0.0
    %47 = vmatpush1.msra.mxu0 0.0
    %48 = vmatprep.subr.mxu0 0.0
    %49 = vmatpush1.msra.mxu0 0.0
    %50 = vmatprep.subr.mxu0 0.0
    %51 = vmatpush1.msra.mxu0 0.0
    %52 = vmatprep.subr.mxu0 0.0
    %53 = vmatpush1.msra.mxu0 0.0
    %54 = vmatprep.subr.mxu0 0.0
    %55 = vmatpush1.msra.mxu0 0.0
    %56 = vmatprep.subr.mxu0 0.0
    %57 = vmatpush1.msra.mxu0 0.0
    %58 = vmatprep.subr.mxu0 0.0
    %59 = vmatpush1.msra.mxu0 0.0
    %60 = vmatprep.subr.mxu0 0.0
    %61 = vmatpush1.msra.mxu0 0.0
    %62 = vmatprep.subr.mxu0 0.0
    %63 = vmatpush1.msra.mxu0 0.0
    %64 = vmatprep.subr.mxu0 0.0
    %65 = vmatpush1.msra.mxu0 0.0
    %66 = vmatprep.subr.mxu0 0.0
    %67 = vmatpush1.msra.mxu0 0.0
    %68 = vmatprep.subr.mxu0 0.0
    %69 = vmatpush1.msra.mxu0 0.0
    %70 = vmatprep.subr.mxu0 0.0
    %71 = vmatpush1.msra.mxu0 0.0
    %72 = vmatprep.subr.mxu0 0.0
    %73 = vmatpush1.msra.mxu0 0.0
    %74 = vmatprep.subr.mxu0 0.0
    %75 = vmatpush1.msra.mxu0 0.0
    %76 = vmatprep.subr.mxu0 0.0
    %77 = vmatpush1.msra.mxu0 0.0
    %78 = vmatprep.subr.mxu0 0.0
    %79 = vmatpush1.msra.mxu0 0.0
    %80 = vmatprep.subr.mxu0 0.0
    %81 = vmatpush1.msra.mxu0 0.0
    %82 = vmatprep.subr.mxu0 0.0
    %83 = vmatpush1.msra.mxu0 0.0
    %84 = vmatprep.subr.mxu0 0.0
    %85 = vmatpush1.msra.mxu0 0.0
    %86 = vmatprep.subr.mxu0 0.0
    %87 = vmatpush1.msra.mxu0 0.0
    %88 = vmatprep.subr.mxu0 0.0
    %89 = vmatpush1.msra.mxu0 0.0
    %90 = vmatprep.subr.mxu0 0.0
    %91 = vmatpush1.msra.mxu0 0.0
    %92 = vmatprep.mubr.f32.mxu0 0.0
    %93 = vmatmul.mubr.f32.gmra.mrb[0].mxu0 %v22
    %v94 = vpop.f32.mrb[0].mxu0
    %v95 = vadd.f32 0.0, %v94
    %v96 = vpop.f32.mrb[0].mxu0
    %97 = vdwg.mxu0
    %v98 = vmax.f32 %v95, 0.0
    %v99 = vld [vmem:[%s2] sm:$0x3]
    %v100 = vld [vmem:[%s3] sm:$0x1]
    %v102 = vlaneseq
    %v103 = vshrl.u32 %v102, 7
    %v104 = vsub.s32 0, %v103
    %v105 = vrot.slane %v100, %v104
    %vm107 = vcmask 15360
    %v109 = vsel %vm107, %v98, 0
    %vm111 = vcmask 1041408
    %v113 = vsel %vm111, %v99, 0
    %115 = vmatprep.subr.mxu0 0.0
    %116 = vmatpush1.msra.mxu0 %v113
    %117 = vmatprep.subr.mxu0 0.0
    %118 = vmatpush1.msra.mxu0 0.0
    %119 = vmatprep.subr.mxu0 0.0
    %120 = vmatpush1.msra.mxu0 0.0
    %121 = vmatprep.subr.mxu0 0.0
    %122 = vmatpush1.msra.mxu0 0.0
    %123 = vmatprep.subr.mxu0 0.0
    %124 = vmatpush1.msra.mxu0 0.0
    %125 = vmatprep.subr.mxu0 0.0
    %126 = vmatpush1.msra.mxu0 0.0
    %127 = vmatprep.subr.mxu0 0.0
    %128 = vmatpush1.msra.mxu0 0.0
    %129 = vmatprep.subr.mxu0 0.0
    %130 = vmatpush1.msra.mxu0 0.0
    %131 = vmatprep.subr.mxu0 0.0
    %132 = vmatpush1.msra.mxu0 0.0
    %133 = vmatprep.subr.mxu0 0.0
    %134 = vmatpush1.msra.mxu0 0.0
    %135 = vmatprep.subr.mxu0 0.0
    %136 = vmatpush1.msra.mxu0 0.0
    %137 = vmatprep.subr.mxu0 0.0
    %138 = vmatpush1.msra.mxu0 0.0
    %139 = vmatprep.subr.mxu0 0.0
    %140 = vmatpush1.msra.mxu0 0.0
    %141 = vmatprep.subr.mxu0 0.0
    %142 = vmatpush1.msra.mxu0 0.0
    %143 = vmatprep.subr.mxu0 0.0
    %144 = vmatpush1.msra.mxu0 0.0
    %145 = vmatprep.subr.mxu0 0.0
    %146 = vmatpush1.msra.mxu0 0.0
    %147 = vmatprep.subr.mxu0 0.0
    %148 = vmatpush1.msra.mxu0 0.0
    %149 = vmatprep.subr.mxu0 0.0
    %150 = vmatpush1.msra.mxu0 0.0
    %151 = vmatprep.subr.mxu0 0.0
    %152 = vmatpush1.msra.mxu0 0.0
    %153 = vmatprep.subr.mxu0 0.0
    %154 = vmatpush1.msra.mxu0 0.0
    %155 = vmatprep.subr.mxu0 0.0
    %156 = vmatpush1.msra.mxu0 0.0
    %157 = vmatprep.subr.mxu0 0.0
    %158 = vmatpush1.msra.mxu0 0.0
    %159 = vmatprep.subr.mxu0 0.0
    %160 = vmatpush1.msra.mxu0 0.0
    %161 = vmatprep.subr.mxu0 0.0
    %162 = vmatpush1.msra.mxu0 0.0
    %163 = vmatprep.subr.mxu0 0.0
    %164 = vmatpush1.msra.mxu0 0.0
    %165 = vmatprep.subr.mxu0 0.0
    %166 = vmatpush1.msra.mxu0 0.0
    %167 = vmatprep.subr.mxu0 0.0
    %168 = vmatpush1.msra.mxu0 0.0
    %169 = vmatprep.subr.mxu0 0.0
    %170 = vmatpush1.msra.mxu0 0.0
    %171 = vmatprep.subr.mxu0 0.0
    %172 = vmatpush1.msra.mxu0 0.0
    %173 = vmatprep.subr.mxu0 0.0
    %174 = vmatpush1.msra.mxu0 0.0
    %175 = vmatprep.subr.mxu0 0.0
    %176 = vmatpush1.msra.mxu0 0.0
    %177 = vmatprep.subr.mxu0 0.0
    %178 = vmatpush1.msra.mxu0 0.0
    %179 = vmatprep.mubr.f32.mxu0 0.0
    %180 = vmatmul.mubr.f32.gmra.mrb[0].mxu0 %v109
    %v181 = vpop.f32.mrb[0].mxu0
    %v182 = vadd.f32 %v105, %v181
    %v183 = vpop.f32.mrb[0].mxu0
    %184 = vdwg.mxu0
    %vm185 = vcmask 25600
    %v186 = vsel %vm185, %v182, -inf
    %187 = vmax.xlane.f32.xlu0 %v186
    %v188 = vpop.xlane.xlu0 %187
    %v189 = vsub.f32 %v182, %v188
    %v190 = vmul.f32 %v189, 1.442695
    %v191 = vpow.pop %v190
    %v192 = vsel %vm185, %v191, 0.0
    %193 = vadd.xlane.f32.xlu0 %v192
    %v194 = vpop.xlane.xlu0 %193
    %v195 = vrcp.pop %v194
    %v196 = vmul.f32 %v191, %v195
    %197 = vst.msk [vmem:[#allocation2] sm:$0x3] %vm185, %v196
    // Predicated region
    $region18: #{tpu_custom_call.1} parent=1 // pred_check
      _
    $region19: #{tpu_custom_call.1} parent=1 // pred_check_branch
      %199 = sbr.rel (0) target = $region21
    $region20: #{tpu_custom_call.1} parent=1 // pred_region
      %s201 = ssub.s32 32, 32
      %202 = vsyncadd [#allocation3], %s201
      %s204 = sshll.u32 [#allocation2], 4
      %s205 = int_to_ptr.vmem [resolvable:$true] %s204
      %207 = dma.vmem_to_hbm [thread:$0]  %s205, 32, %s4, [#allocation3]
    $region21: #{tpu_custom_call.1} parent=1 // pred_fallthru
      _
    // Predicated region
    $region22: #{tpu_custom_call.1} parent=1 // pred_check
      _
    $region23: #{tpu_custom_call.1} parent=1 // pred_check_branch
      %209 = sbr.rel (0) target = $region25
    $region24: #{tpu_custom_call.1} parent=1 // pred_region
      %210 = dma.done [#allocation3], 32
    $region25: #{tpu_custom_call.1} parent=1 // pred_fallthru
      _
    %211 = vsyncpa [#allocation3], 1

</llo_original>
